<compile_context>
chip_gen: v7x
topology: tpu7x:2x2x1
jax: 0.10.0
libtpu: 0.0.40
codegen_flags: <defaults>
</compile_context>

<pallas_src>
import functools

import jax
import jax.numpy as jnp
from jax.experimental import pallas as pl
from jax.experimental.pallas import tpu as pltpu


# ---------------------------------------------------------------------------
# Kernels
# ---------------------------------------------------------------------------

def _embed_kernel_small(counts_ref, wflat_ref, out_ref):
    """Row-resident path: one gene tile covers the whole (E+1)*C lane extent.

    counts_ref : (TG, C)          raw per-gene counts (any numeric dtype)
    wflat_ref  : (1, E*C)         embedding weight, transposed & row-major flat
    out_ref    : (TG, (E+1)*C)    flattened (lane-dense) output tile
    """
    tg = out_ref.shape[0]
    ec = wflat_ref.shape[1]            # E * C
    c = counts_ref.shape[1]
    # Two direct slice stores (no concatenate, no materialized concat temp):
    #   lanes [0, E*C)        <- weight.T broadcast over the gene tile
    #   lanes [E*C, E*C + C)  <- per-gene counts cast to f32 (fused cast)
    out_ref[:, 0:ec] = jnp.broadcast_to(wflat_ref[...], (tg, ec))
    out_ref[:, ec:ec + c] = counts_ref[...].astype(jnp.float32)
    # TODO(synk): v7x-only micro-opt: skip the constant weight-slab store on grid
    # steps >= 2 with pipeline_mode=pl.Buffered(2) on out_specs; omitted because
    # it relies on output-buffer reuse semantics and the kernel is HBM-writeback
    # bound (the saved vst work is hidden) on v5e/v6e.


def _embed_kernel_large(counts_ref, wt_ref, out_ref, *, count_plane_local):
    """Cell/plane-tiled path for rows too large to keep resident in VMEM.

    counts_ref : (TG, C)       raw per-gene counts
    wt_ref     : (TE, C)       tile of the transposed (row-padded) weight
    out_ref    : (TG, TE, C)   output tile covering planes [j*TE, j*TE + TE)
    """
    tg, te, c = out_ref.shape
    out_ref[...] = jnp.broadcast_to(wt_ref[...][None, :, :], (tg, te, c))
    # The counts plane (plane index E) always falls in the LAST plane tile;
    # its local sublane index is a Python constant closed over by the kernel.
    @pl.when(pl.program_id(1) == pl.num_programs(1) - 1)
    def _():
        cp = count_plane_local
        out_ref[:, cp:cp + 1, :] = (
            counts_ref[...].astype(jnp.float32)[:, None, :])


# ---------------------------------------------------------------------------
# Tile sizing
# ---------------------------------------------------------------------------

def _vmem_capacity_bytes():
    try:
        return int(pltpu.get_tpu_info().vmem_capacity_bytes)
    except Exception:
        return 64 * 1024 * 1024   # conservative: v7x per-TensorCore VMEM


def _round_up(x, m):
    return (x + m - 1) // m * m


def _choose_gene_tile(G, E, C, budget):
    """Largest gene tile (multiple of 8) whose real working set fits `budget`."""
    out_row = (E + 1) * C * 4                 # f32 output row per gene
    in_row = C * 4                            # counts row (<= 4B dtypes)
    per_gene = 2 * (out_row + in_row)         # double-buffered out + counts
    weight_bytes = 2 * E * C * 4              # weight block, double-buffered
    avail = max(budget - weight_bytes, 8 * per_gene)
    tg = max(avail // per_gene, 8)
    tg = max(8, (tg // 8) * 8)
    tg = min(tg, 512)                         # HBM roofline saturates by ~512 rows
    # Aim for >= 4 grid steps so each v7x TensorCore gets >= 2 (pipelined) steps.
    tg = min(tg, max(8, _round_up(pl.cdiv(G, 4), 8)))
    # Prefer an even number of grid steps for megacore load balance.
    steps = pl.cdiv(G, tg)
    if steps > 1 and steps % 2 == 1:
        tg = max(8, _round_up(pl.cdiv(G, steps + 1), 8))
    return int(tg)


def _choose_cell_tiles(G, E, C, budget):
    """(gene tile, plane tile) for the cell/plane-tiled path.

    Working set ~= 2*tg*te*C (out) + 2*tg*C (counts) + 2*te*C (weight), f32.
    """
    te_full = _round_up(E + 1, 8)
    tg = min(256, max(8, _round_up(pl.cdiv(G, 4), 8)))
    te = 8
    while True:
        te = int((budget / (8.0 * C) - tg) / (tg + 1))
        te = (te // 8) * 8
        if te >= 8 or tg <= 8:
            break
        tg -= 8
    te = max(8, min(te, te_full))
    return int(tg), int(te)


def _vmem_limit(working_set_bytes, cap):
    return int(min(cap * 15 // 16,
                   max(working_set_bytes * 3 // 2, 32 * 1024 * 1024)))


# ---------------------------------------------------------------------------
# Wrappers
# ---------------------------------------------------------------------------

def _cost_estimate(G, E, C):
    return pl.CostEstimate(
        flops=G * (E + 1) * C,
        transcendentals=0,
        bytes_accessed=4 * G * (E + 1) * C + 4 * G * C + 4 * E * C)


def _embed_small(counts, w_flat, G, E, C, budget, cap):
    tg = _choose_gene_tile(G, E, C, budget)
    working_set = (2 * tg * ((E + 1) * C + C) + 2 * E * C) * 4
    out_flat = pl.pallas_call(
        _embed_kernel_small,
        out_shape=jax.ShapeDtypeStruct((G, (E + 1) * C), jnp.float32),
        grid=(pl.cdiv(G, tg),),                       # ragged tail: OOB writes dropped
        in_specs=[
            pl.BlockSpec((tg, C), lambda i: (i, 0)),       # counts tile
            pl.BlockSpec((1, E * C), lambda i: (0, 0)),    # flat weight.T (resident)
        ],
        out_specs=pl.BlockSpec((tg, (E + 1) * C), lambda i: (i, 0)),
        compiler_params=pltpu.CompilerParams(
            dimension_semantics=("parallel",),
            vmem_limit_bytes=_vmem_limit(working_set, cap)),
        cost_estimate=_cost_estimate(G, E, C),
    )(counts, w_flat)
    # Row-major reshape of a contiguous array: metadata-only, no HBM copy.
    return out_flat.reshape(G, E + 1, C)


def _embed_large(counts, w_t, G, E, C, budget, cap):
    tg, te = _choose_cell_tiles(G, E, C, budget)
    n_plane_blocks = pl.cdiv(E + 1, te)
    # Pad weight rows so every (te, C) weight block read stays in bounds; padded
    # (zero) rows only land in the counts plane (overwritten) or out-of-bounds
    # output planes (dropped by Pallas). One-time cost ~ E*C*4 bytes.
    rows_pad = n_plane_blocks * te
    if rows_pad != E:
        w_t = jnp.pad(w_t, ((0, rows_pad - E), (0, 0)))
    count_plane_local = E - (n_plane_blocks - 1) * te
    kernel = functools.partial(_embed_kernel_large,
                               count_plane_local=count_plane_local)
    working_set = (2 * tg * te * C + 2 * tg * C + 2 * te * C) * 4
    return pl.pallas_call(
        kernel,
        out_shape=jax.ShapeDtypeStruct((G, E + 1, C), jnp.float32),
        grid=(pl.cdiv(G, tg), n_plane_blocks),
        in_specs=[
            pl.BlockSpec((tg, C), lambda i, j: (i, 0)),    # counts tile
            pl.BlockSpec((te, C), lambda i, j: (j, 0)),    # weight.T plane tile
        ],
        out_specs=pl.BlockSpec((tg, te, C), lambda i, j: (i, j, 0)),
        compiler_params=pltpu.CompilerParams(
            dimension_semantics=("parallel", "parallel"),
            vmem_limit_bytes=_vmem_limit(working_set, cap)),
        cost_estimate=_cost_estimate(G, E, C),
    )(counts, w_t)


def scrnaseq_embedding(scRNA_count, embedding_weight, *, force_cell_tiling=False):
    """Pallas implementation of scRNASeqEmbedding.forward.

    scRNA_count      : (num_genes, num_cells), any numeric dtype
    embedding_weight : (num_cells, embedding_dim)
    returns          : (num_genes, embedding_dim + 1, num_cells) float32
    """
    G, C = scRNA_count.shape
    Cw, E = embedding_weight.shape
    assert Cw == C, "embedding table rows must equal num_cells"

    cap = _vmem_capacity_bytes()
    budget = cap * 3 // 5                      # headroom for compiler scratch

    w_t = embedding_weight.astype(jnp.float32).T          # (E, C)

    # Row-resident path only if even an 8-gene tile of full-width rows fits.
    min_small_ws = (2 * 8 * ((E + 1) * C + C) + 2 * E * C) * 4
    if force_cell_tiling or min_small_ws > budget:
        return _embed_large(scRNA_count, w_t, G, E, C, budget, cap)

    # Row-major flatten of (E, C) matches the row-major flatten of the output's
    # trailing (E+1, C) dims -> kernel works on a lane-dense 2-D slab.
    w_flat = w_t.reshape(1, E * C)
    return _embed_small(scRNA_count, w_flat, G, E, C, budget, cap)


# ---------------------------------------------------------------------------
# Reference + self-test
# ---------------------------------------------------------------------------

def _reference(scRNA_count, embedding_weight):
    counts = scRNA_count.astype(jnp.float32)
    G, C = counts.shape
    emb = embedding_weight.astype(jnp.float32)               # (C, E)
    embedded_cells = jnp.broadcast_to(emb.T[None, :, :], (G, emb.shape[1], C))
    counts_exp = counts[:, None, :]
    return jnp.concatenate([embedded_cells, counts_exp], axis=1)


if __name__ == "__main__":
    num_genes = 20          # deliberately not a multiple of the gene tile
    num_cells = 16
    embedding_dim = 32

    key = jax.random.PRNGKey(0)
    k_w, k_x = jax.random.split(key)

    # Deterministic xavier-uniform init (fan_in=num_cells, fan_out=embedding_dim).
    bound = (6.0 / (num_cells + embedding_dim)) ** 0.5
    embedding_weight = jax.random.uniform(
        k_w, (num_cells, embedding_dim), minval=-bound, maxval=bound,
        dtype=jnp.float32)

    # Synthetic raw count matrix (non-negative integers); f32 cast happens in-kernel.
    scRNA_count = jax.random.randint(k_x, (num_genes, num_cells), 0, 100,
                                     dtype=jnp.int32)

    ref = _reference(scRNA_count, embedding_weight)

    # Default (row-resident, lane-dense slab) path.
    out = jax.block_until_ready(scrnaseq_embedding(scRNA_count, embedding_weight))
    assert out.shape == (num_genes, embedding_dim + 1, num_cells)
    assert out.dtype == jnp.float32
    assert jnp.array_equal(out, ref), "row-resident path mismatch vs reference"

    # Also exercise the cell/plane-tiled path used for large (E+1)*C rows.
    out2 = jax.block_until_ready(
        scrnaseq_embedding(scRNA_count, embedding_weight, force_cell_tiling=True))
    assert out2.shape == (num_genes, embedding_dim + 1, num_cells)
    assert jnp.array_equal(out2, ref), "cell-tiled path mismatch vs reference"

    print("KERNEL_OK")
</pallas_src>

<mosaic_0001>
module attributes {stable_mosaic.version = 11 : i64} {
  func.func @_embed_kernel_small(%arg0: i32, %arg1: memref<8x16xi32, #tpu.memory_space<vmem>>, %arg2: memref<1x512xf32, #tpu.memory_space<vmem>>, %arg3: memref<8x528xf32, #tpu.memory_space<vmem>>) attributes {dimension_semantics = [#tpu.dimension_semantics<parallel>], iteration_bounds = array<i64: 3>, scalar_prefetch = 0 : i64, scratch_operands = 0 : i64, tpu.core_type = #tpu.core_type<tc>, window_params = [{transform_indices = @transform_0, window_bounds = array<i64: 8, 16>}, {pipeline_mode = #tpu.pipeline_mode<synchronous>, transform_indices = @transform_1, window_bounds = array<i64: 1, 512>}, {transform_indices = @transform_2, window_bounds = array<i64: 8, 528>}]} {
    %c0 = arith.constant 0 : index
    %c0_0 = arith.constant 0 : index
    %0 = vector.load %arg2[%c0, %c0_0] : memref<1x512xf32, #tpu.memory_space<vmem>>, vector<1x512xf32>
    %1 = vector.shape_cast %0 : vector<1x512xf32> to vector<1x512xf32>
    %2 = vector.broadcast %1 : vector<1x512xf32> to vector<8x512xf32>
    %c0_1 = arith.constant 0 : index
    %c0_2 = arith.constant 0 : index
    %3 = vector.load %arg3[%c0_1, %c0_2] : memref<8x528xf32, #tpu.memory_space<vmem>>, vector<8x512xf32>
    tpu.vector_store %arg3[%c0_1, %c0_2], %2 {strides = array<i32>} : memref<8x528xf32, #tpu.memory_space<vmem>>, vector<8x512xf32>,
    %c0_3 = arith.constant 0 : index
    %c0_4 = arith.constant 0 : index
    %4 = vector.load %arg1[%c0_3, %c0_4] : memref<8x16xi32, #tpu.memory_space<vmem>>, vector<8x16xi32>
    %5 = arith.sitofp %4 : vector<8x16xi32> to vector<8x16xf32>
    %c0_5 = arith.constant 0 : index
    %c512 = arith.constant 512 : index
    %6 = vector.load %arg3[%c0_5, %c512] : memref<8x528xf32, #tpu.memory_space<vmem>>, vector<8x16xf32>
    tpu.vector_store %arg3[%c0_5, %c512], %5 {strides = array<i32>} : memref<8x528xf32, #tpu.memory_space<vmem>>, vector<8x16xf32>,
    return
  }
  func.func @transform_0(%arg0: i32) -> (i32, i32) {
    %c0_i32 = arith.constant 0 : i32
    %c0_i32_0 = arith.constant 0 : i32
    return %arg0, %c0_i32 : i32, i32
  }
  func.func @transform_1(%arg0: i32) -> (i32, i32) {
    %c0_i32 = arith.constant 0 : i32
    %c0_i32_0 = arith.constant 0 : i32
    %c0_i32_1 = arith.constant 0 : i32
    return %c0_i32, %c0_i32_0 : i32, i32
  }
  func.func @transform_2(%arg0: i32) -> (i32, i32) {
    %c0_i32 = arith.constant 0 : i32
    %c0_i32_0 = arith.constant 0 : i32
    return %arg0, %c0_i32 : i32, i32
  }
}

</mosaic_0001>

<llo_original>
// kernel: tpu_custom_call.1
$region0: #{tpu_custom_call.1}
  #allocation0 [shape = 'u32[]', space=smem, size = 0x4, offset = 0x4, fixed_abs, tag = 'smem constant byte address 0x4 - core index']
  #allocation1 [shape = 'u32[144,128]{1,0:T(1,128)}', space=vmem, size = 0x12000, scoped, tag = 'internal scratch']
  %s0 = inlined_call_operand.vmem [shape: s32[20,16], index: 0, kind: input, shape index: {}]
  %s1 = inlined_call_operand.vmem [shape: f32[1,512], index: 1, kind: input, shape index: {}]
  %s2 = inlined_call_operand.hbm [shape: f32[20,528], index: 2, kind: output, shape index: {}]
  %s3 = sld [smem:[#allocation0]]
  $region41: #{tpu_custom_call.1} parent=0
    _
  %s5 = ssub.s32 1, %s3
  %s6 = scalar_select 0, %s5, %s3
  $region1: #{tpu_custom_call.1} parent=0
    #allocation2 [shape = 'u8[40960]{0}', space=vmem, size = 0xa000, scoped, tag = 'output window, operand 0']
    #allocation3 [shape = 's32[2]{0}', space=sflag, size = 0x8, scoped, tag = 'scoped memory for tpu_custom_call.1']
    %7 = vsyncpa [#allocation3], 0
    %s8 = scalar_lea.sflag [#allocation3], 1
    %9 = vsyncpa %s8, 0
    loop: start=0, step=1, limit=5
    $region2: #{tpu_custom_call.1} parent=1 // loop_pre_header
      _
    $region3: #{tpu_custom_call.1} parent=1 // loop_header
      %s11 = sphi 0, %s15
      %p12 = scmp.ge.s32.totalorder %s11, 5
      %s21 = sphi 0, %s23
      %s24 = sphi 0, %s21
      %s25 = sphi 0, %s24
      %s41 = sphi 0, %s25
      %s45 = sphi 0, %s45
      %s47 = sphi 0, %s45
      %s48 = sphi 0, %s47
      %s62 = sphi 0, %s48
      %s68 = sphi 0, %s70
      %s71 = sphi 0, %s68
      %s72 = sphi 0, %s71
      %s88 = sphi 0, %s72
    $region4: #{tpu_custom_call.1} parent=1 // loop_header_branch
      %14 = sbr.rel (%p12) target = $region8
    $region5: #{tpu_custom_call.1} parent=1 // loop_body
      %s16 = ssub.s32 %s11, 1
      %s17 = ssub.s32 %s11, 2
      %s18 = sadd.s32 %s11, 1
      %s19 = ssub.s32 %s11, %s18
      %p20 = scmp.eq.s32.totalorder %s19, 0
      %s22 = sadd.s32 %s21, 1
      %s23 = scalar_select %p20, %s21, %s22
      %p26 = pneg %p20
      %p27 = scmp.eq.s32.totalorder %s11, 2
      %p28 = por %p26, %p27
      %p29 = scmp.ne.s32.totalorder %s21, %s24
      %p30 = scmp.eq.s32.totalorder %s11, 0
      %p31 = por %p29, %p30
      %p32 = scmp.ne.s32.totalorder %s21, %s24
      %p33 = scmp.eq.s32.totalorder %s16, 2
      %p34 = por %p32, %p33
      %p35 = scmp.ne.s32.totalorder %s24, %s25
      %p36 = scmp.eq.s32.totalorder %s16, 0
      %p37 = por %p35, %p36
      %p38 = scmp.ne.s32.totalorder %s24, %s25
      %p39 = scmp.eq.s32.totalorder %s17, 2
      %p40 = por %p38, %p39
      %p42 = scmp.ne.s32.totalorder %s25, %s41
      %p43 = scmp.eq.s32.totalorder %s17, 0
      %p44 = por %p42, %p43
      %s46 = sadd.s32 %s45, 1
      %p49 = scmp.eq.s32.totalorder %s11, 2
      %p50 = scmp.ne.s32.totalorder %s45, %s47
      %p51 = scmp.eq.s32.totalorder %s11, 0
      %p52 = por %p50, %p51
      %p53 = scmp.ne.s32.totalorder %s45, %s47
      %p54 = scmp.eq.s32.totalorder %s16, 2
      %p55 = por %p53, %p54
      %p56 = scmp.ne.s32.totalorder %s47, %s48
      %p57 = scmp.eq.s32.totalorder %s16, 0
      %p58 = por %p56, %p57
      %p59 = scmp.ne.s32.totalorder %s47, %s48
      %p60 = scmp.eq.s32.totalorder %s17, 2
      %p61 = por %p59, %p60
      %p63 = scmp.ne.s32.totalorder %s48, %s62
      %p64 = scmp.eq.s32.totalorder %s17, 0
      %p65 = por %p63, %p64
      %s66 = ssub.s32 %s11, %s18
      %p67 = scmp.eq.s32.totalorder %s66, 0
      %s69 = sadd.s32 %s68, 1
      %s70 = scalar_select %p67, %s68, %s69
      %p73 = pneg %p67
      %p74 = scmp.eq.s32.totalorder %s11, 2
      %p75 = por %p73, %p74
      %p76 = scmp.ne.s32.totalorder %s68, %s71
      %p77 = scmp.eq.s32.totalorder %s11, 0
      %p78 = por %p76, %p77
      %p79 = scmp.ne.s32.totalorder %s68, %s71
      %p80 = scmp.eq.s32.totalorder %s16, 2
      %p81 = por %p79, %p80
      %p82 = scmp.ne.s32.totalorder %s71, %s72
      %p83 = scmp.eq.s32.totalorder %s16, 0
      %p84 = por %p82, %p83
      %p85 = scmp.ne.s32.totalorder %s71, %s72
      %p86 = scmp.eq.s32.totalorder %s17, 2
      %p87 = por %p85, %p86
      %p89 = scmp.ne.s32.totalorder %s72, %s88
      %p90 = scmp.eq.s32.totalorder %s17, 0
      %p91 = por %p89, %p90
      %p92 = scmp.le.s32.totalorder 1, %s11
      %p93 = scmp.lt.s32.totalorder %s11, 4
      %p94 = pnand %p92, %p93
      %p95 = pneg %p94
      // Predicated region
      $region9: #{tpu_custom_call.1} parent=5 // pred_check
        _
      $region10: #{tpu_custom_call.1} parent=5 // pred_check_branch
        %97 = sbr.rel (%p94) target = $region12
      $region11: #{tpu_custom_call.1} parent=5 // pred_region
        %s98 = ssub.s32 %s11, 1
        // Predicated region
        $region13: #{tpu_custom_call.1} parent=11 // pred_check
          %p99 = pneg %p58
        $region14: #{tpu_custom_call.1} parent=11 // pred_check_branch
          %101 = sbr.rel (%p99) target = $region16
        $region15: #{tpu_custom_call.1} parent=11 // pred_region
          _
        $region16: #{tpu_custom_call.1} parent=11 // pred_fallthru
          _
      $region12: #{tpu_custom_call.1} parent=5 // pred_fallthru
        _
      %p102 = scmp.lt.s32.totalorder %s11, 3
      // Predicated region
      $region17: #{tpu_custom_call.1} parent=5 // pred_check
        %p103 = pneg %p102
      $region18: #{tpu_custom_call.1} parent=5 // pred_check_branch
        %105 = sbr.rel (%p103) target = $region20
      $region19: #{tpu_custom_call.1} parent=5 // pred_region
        // Predicated region
        $region21: #{tpu_custom_call.1} parent=19 // pred_check
          %p106 = pneg %p31
        $region22: #{tpu_custom_call.1} parent=19 // pred_check_branch
          %108 = sbr.rel (%p106) target = $region24
        $region23: #{tpu_custom_call.1} parent=19 // pred_region
          %p109 = scmp.lt.s32.totalorder %s11, 2
          %s110 = scalar_select %p109, %s11, 2
          %s111 = smul.addr %s110, 8
          %s112 = scalar_lea.vmem %s0, %s111
        $region24: #{tpu_custom_call.1} parent=19 // pred_fallthru
          _
      $region20: #{tpu_custom_call.1} parent=5 // pred_fallthru
        _
      %p113 = scmp.le.s32.totalorder 1, %s11
      %p114 = scmp.lt.s32.totalorder %s11, 4
      %p115 = pnand %p113, %p114
      %p116 = pneg %p115
      // Predicated region
      $region25: #{tpu_custom_call.1} parent=5 // pred_check
        _
      $region26: #{tpu_custom_call.1} parent=5 // pred_check_branch
        %118 = sbr.rel (%p115) target = $region28
      $region27: #{tpu_custom_call.1} parent=5 // pred_region
        %s119 = ssub.s32 %s11, 1
        %p120 = scmp.lt.s32.totalorder %s16, 2
        %s121 = scalar_select %p120, %s16, 2
        %s122 = smul.addr %s121, 8
        %s123 = scalar_lea.vmem %s0, %s122
        %p124 = pneg %p37
        %p125 = pneg %p34
        %p126 = pneg %p58
        %p127 = pneg %p55
        %p128 = pneg %p84
        %p129 = pneg %p81
        %s130 = sand.u32 %s71, 1
        %s131 = scalar_lea.sflag [#allocation3], %s130
        %s132 = sand.u32 %s71, 1
        %s133 = smul.addr %s132, 40
        %s134 = scalar_lea.vmem [#allocation2], %s133
        %p135 = scmp.lt.s32.totalorder %s16, 2
        %s136 = scalar_select %p135, %s16, 2
        %s137 = smul.addr %s136, 8
        %s138 = scalar_lea.vmem %s0, %s137
        %v139 = vld [vmem:[%s1] sm:$0xf]
        %v141 = vlaneseq
        %v142 = vshrl.u32 %v141, 7
        %v143 = vsub.s32 0, %v142
        %v144 = vrot.slane %v139, %v143
        %v145 = vlaneseq
        %v146 = vshrl.u32 %v145, 7
        %v147 = vsub.s32 1, %v146
        %v148 = vrot.slane %v139, %v147
        %v149 = vlaneseq
        %v150 = vshrl.u32 %v149, 7
        %v151 = vsub.s32 2, %v150
        %v152 = vrot.slane %v139, %v151
        %v153 = vlaneseq
        %v154 = vshrl.u32 %v153, 7
        %v155 = vsub.s32 3, %v154
        %v156 = vrot.slane %v139, %v155
        %161 = vst [vmem:[%s134] sm:$0xff] %v144
        %162 = vst [vmem:[%s134 + $0x8] sm:$0xff] %v148
        %163 = vst [vmem:[%s134 + $0x10] sm:$0xff] %v152
        %164 = vst [vmem:[%s134 + $0x18] sm:$0xff] %v156
        %v165 = vld [vmem:[%s138] sm:$0xff]
        %v166 = vcvt.s32.f32 %v165
        %vm167 = vcmask 130048
        %168 = vst.msk [vmem:[%s134 + $0x20] sm:$0xff] %vm167, %v166
        %s169 = sand.u32 %s71, 1
        %s170 = scalar_lea.sflag [#allocation3], %s169
        %s171 = sand.u32 %s71, 1
        %s172 = smul.addr %s171, 40
        %s173 = scalar_lea.vmem [#allocation2], %s172
        // Predicated region
        $region29: #{tpu_custom_call.1} parent=27 // pred_check
          %p174 = pneg %p81
        $region30: #{tpu_custom_call.1} parent=27 // pred_check_branch
          %176 = sbr.rel (%p174) target = $region32
        $region31: #{tpu_custom_call.1} parent=27 // pred_region
          %s178 = ssub.s32 640, 640
          %179 = vsyncadd %s170, %s178
          %s180 = smul.addr %s16, 5
          %s181 = smul.addr %s180, 128
          %s182 = scalar_lea.hbm %s2, %s181
          %s184 = sshll.u32 %s173, 4
          %s185 = int_to_ptr.vmem [resolvable:$true] %s184
          %187 = dma.vmem_to_hbm [thread:$0]  %s185, 640, %s182, %s170
        $region32: #{tpu_custom_call.1} parent=27 // pred_fallthru
          _
      $region28: #{tpu_custom_call.1} parent=5 // pred_fallthru
        _
      %p188 = scmp.le.s32.totalorder 2, %s11
      // Predicated region
      $region33: #{tpu_custom_call.1} parent=5 // pred_check
        %p189 = pneg %p188
      $region34: #{tpu_custom_call.1} parent=5 // pred_check_branch
        %191 = sbr.rel (%p189) target = $region36
      $region35: #{tpu_custom_call.1} parent=5 // pred_region
        %s192 = ssub.s32 %s11, 2
        // Predicated region
        $region37: #{tpu_custom_call.1} parent=35 // pred_check
          %p193 = pneg %p87
        $region38: #{tpu_custom_call.1} parent=35 // pred_check_branch
          %195 = sbr.rel (%p193) target = $region40
        $region39: #{tpu_custom_call.1} parent=35 // pred_region
          %s196 = sand.u32 %s72, 1
          %s197 = scalar_lea.sflag [#allocation3], %s196
          %s198 = sand.u32 %s72, 1
          %s199 = smul.addr %s198, 40
          %s200 = scalar_lea.vmem [#allocation2], %s199
          %201 = dma.done %s197, 640
        $region40: #{tpu_custom_call.1} parent=35 // pred_fallthru
          _
      $region36: #{tpu_custom_call.1} parent=5 // pred_fallthru
        _
    $region6: #{tpu_custom_call.1} parent=1 // loop_footer
      %s15 = sadd.s32 1, %s11
    $region7: #{tpu_custom_call.1} parent=1 // loop_footer_branch
      %10 = sbr.rel target = $region3
    $region8: #{tpu_custom_call.1} parent=1 // loop_exit
      _
    %202 = vsyncpa [#allocation3], 1
    %s203 = scalar_lea.sflag [#allocation3], 1
    %204 = vsyncpa %s203, 1

</llo_original>
